<compile_context>
chip_gen: v7x
topology: tpu7x:2x2x1
jax: 0.10.0
libtpu: 0.0.40
codegen_flags: <defaults>
</compile_context>

<pallas_src>
import jax
import jax.numpy as jnp
from jax.experimental import pallas as pl
from jax.experimental.pallas import tpu as pltpu


def _shift_body(x_ref, prev_ref, next_ref, o_ref):
    """Write the spatially-shifted block.

    prev_ref / next_ref are 1-w-row halos (clamped at image edges by their
    index_maps).  They are None on the whole-image path, where the block spans
    the full w extent and the clamped edge rows come from x_ref itself.
    """
    kb, tw, h, c = x_ref.shape
    g = c // 4

    # Per-lane channel-group masks, (1,1,1,c) -- never block-sized; jnp.where
    # broadcasts them over the (kb, n, h, c) operands.
    lane = jax.lax.broadcasted_iota(jnp.int32, (1, 1, 1, c), 3)
    m_g0 = lane < g            # group 0 vs group 1 inside the h-shifted half
    m_h = lane < 2 * g         # h-shifted groups (0,1) vs w-shifted groups (2,3)
    m_wp = lane < 3 * g        # group 2 (w-prev) vs group 3 (w-next)

    def combine(xc, xp, xn):
        # xc: rows aligned with the destination (feeds the h-shift groups);
        # xp / xn: the w-1 / w+1 source rows (feed groups 2 / 3).
        if h > 1:
            # +-1 shift along h (sublane axis) with the kept edge row baked in.
            # TODO(synk): switch to pltpu.roll(axis=-2) + iota edge-fix (XLU
            # slot) once >=3-D / bf16 roll lowering is verified on all targets.
            v0 = jnp.concatenate([xc[:, :, :1, :], xc[:, :, :h - 1, :]], axis=2)
            v1 = jnp.concatenate([xc[:, :, 1:, :], xc[:, :, h - 1:, :]], axis=2)
            vh = jnp.where(m_g0, v0, v1)
        else:
            vh = xc
        return jnp.where(m_h, vh, jnp.where(m_wp, xp, xn))

    # Destination w-row 0 of this block.
    xp0 = prev_ref[...] if prev_ref is not None else x_ref[:, 0:1, :, :]
    if tw > 1:
        xn0 = x_ref[:, 1:2, :, :]
    else:
        xn0 = next_ref[...] if next_ref is not None else x_ref[:, 0:1, :, :]
    o_ref[:, 0:1, :, :] = combine(x_ref[:, 0:1, :, :], xp0, xn0)

    # Interior destination w-rows 1 .. tw-2: the +-1 w-shift operands are plain
    # offset reads of x_ref (leading-dim re-addressing, no copies).
    if tw > 2:
        o_ref[:, 1:tw - 1, :, :] = combine(x_ref[:, 1:tw - 1, :, :],
                                           x_ref[:, 0:tw - 2, :, :],
                                           x_ref[:, 2:tw, :, :])

    # Destination w-row tw-1.
    if tw > 1:
        xnl = next_ref[...] if next_ref is not None else x_ref[:, tw - 1:tw, :, :]
        o_ref[:, tw - 1:tw, :, :] = combine(x_ref[:, tw - 1:tw, :, :],
                                            x_ref[:, tw - 2:tw - 1, :, :],
                                            xnl)


def _shift_kernel_full(x_ref, o_ref):
    _shift_body(x_ref, None, None, o_ref)


def _shift_kernel_halo(x_ref, prev_ref, next_ref, o_ref):
    _shift_body(x_ref, prev_ref, next_ref, o_ref)


def _divisors(n):
    return [d for d in range(1, n + 1) if n % d == 0]


def _vmem_budget():
    """Generation-aware (target_block_bytes, vmem_limit_bytes)."""
    cap = None
    try:
        cap = getattr(pltpu.get_tpu_info(), "vmem_capacity_bytes", None)
    except Exception:
        cap = None
    if not cap:
        cap = 64 * 1024 * 1024          # conservative: v7x per-TensorCore VMEM
    vmem_limit = int(min(cap // 2, 48 * 1024 * 1024))
    target_block = vmem_limit // 10     # in/out double-buffer + temps headroom
    return target_block, vmem_limit


def _pick_tiles(b, w, row_bytes, target_bytes, min_steps):
    """Pick (kb, tw): images folded per block, w-rows per block."""
    img_bytes = w * row_bytes
    fits = [d for d in _divisors(w) if d * row_bytes <= target_bytes]
    tw = max(fits) if fits else 1       # a single w-row may exceed the target;
    kb = 1                              # the caller raises vmem_limit for it.
    if tw == w:
        for d in _divisors(b):
            if d * img_bytes <= target_bytes:
                kb = d
    # Keep enough grid steps for pipelining and 2-TC (v7x) sharding.
    while (b // kb) * (w // tw) < min_steps:
        if kb > 1:
            kb = max(d for d in _divisors(b) if d < kb)
        elif tw > 1:
            tw = max(d for d in _divisors(w) if d < tw)
        else:
            break
    return kb, tw


def spatial_shift_block2(x, *, target_block_bytes=None, vmem_limit_bytes=None,
                         min_grid_steps=8):
    b, w, h, c = x.shape
    if c % 4 != 0:
        raise ValueError("channel dim must be divisible by 4")
    itemsize = x.dtype.itemsize

    auto_block, auto_vmem = _vmem_budget()
    if target_block_bytes is None:
        target_block_bytes = auto_block
    if vmem_limit_bytes is None:
        vmem_limit_bytes = auto_vmem

    kb, tw = _pick_tiles(b, w, h * c * itemsize, target_block_bytes,
                         min_grid_steps)
    grid = (b // kb, w // tw)
    block_bytes = kb * tw * h * c * itemsize
    vmem_limit_bytes = int(max(vmem_limit_bytes, 10 * block_bytes))

    blk = pl.BlockSpec((kb, tw, h, c), lambda bi, wi: (bi, wi, 0, 0))
    has_halo = tw < w
    if has_halo:
        # 1-row halos along w (block w-size 1 => block index == row index),
        # clamped at the image edges so edge rows resolve to "keep original".
        prev_spec = pl.BlockSpec(
            (kb, 1, h, c),
            lambda bi, wi: (bi, jnp.maximum(wi * tw - 1, 0), 0, 0))
        next_spec = pl.BlockSpec(
            (kb, 1, h, c),
            lambda bi, wi: (bi, jnp.minimum(wi * tw + tw, w - 1), 0, 0))
        in_specs = [blk, prev_spec, next_spec]
        kernel = _shift_kernel_halo
        args = (x, x, x)
        halo_bytes = 2 * b * (w // tw) * h * c * itemsize
    else:
        in_specs = [blk]
        kernel = _shift_kernel_full
        args = (x,)
        halo_bytes = 0

    return pl.pallas_call(
        kernel,
        out_shape=jax.ShapeDtypeStruct((b, w, h, c), x.dtype),
        grid=grid,
        in_specs=in_specs,
        out_specs=blk,
        compiler_params=pltpu.CompilerParams(
            dimension_semantics=("parallel", "parallel"),
            vmem_limit_bytes=vmem_limit_bytes),
        cost_estimate=pl.CostEstimate(
            flops=0,
            transcendentals=0,
            bytes_accessed=int(2 * x.size * itemsize + halo_bytes)),
    )(*args)


def _reference(x):
    # Pure-JAX reference with identical (functional) semantics.
    b, w, h, c = x.shape
    g = c // 4
    out = x
    out = out.at[:, :, 1:, :g].set(x[:, :, :h - 1, :g])
    out = out.at[:, :, :h - 1, g:2 * g].set(x[:, :, 1:, g:2 * g])
    out = out.at[:, 1:, :, 2 * g:3 * g].set(x[:, :w - 1, :, 2 * g:3 * g])
    out = out.at[:, :w - 1, :, 3 * g:].set(x[:, 1:, :, 3 * g:])
    return out


if __name__ == "__main__":
    key = jax.random.PRNGKey(0)
    b, w, h, c = 2, 16, 16, 8   # (b, w, h, c) as in the module's forward
    x = jax.random.normal(key, (b, w, h, c), dtype=jnp.float32)
    ref = jax.block_until_ready(_reference(x))

    # 1) default auto tiling (small image => w-tiled halo path after the
    #    min-step split keeps the grid pipelined / 2-TC friendly).
    out = jax.block_until_ready(spatial_shift_block2(x))
    assert out.shape == ref.shape and out.dtype == ref.dtype
    assert jnp.allclose(out, ref), "mismatch (default tiling)"

    # 2) whole-image, no-halo, folded-batch path (2-ref kernel variant).
    out_full = jax.block_until_ready(spatial_shift_block2(x, min_grid_steps=1))
    assert jnp.allclose(out_full, ref), "mismatch (whole-image path)"

    # 3) tiny blocks: tw == 1, every destination row handled by the halos.
    out_tiny = jax.block_until_ready(
        spatial_shift_block2(x, target_block_bytes=512))
    assert jnp.allclose(out_tiny, ref), "mismatch (tw=1 halo path)"

    # 4) bf16 stays bf16 and bit-exact (pure data movement, no upcast).
    xb = x.astype(jnp.bfloat16)
    outb = jax.block_until_ready(spatial_shift_block2(xb))
    refb = _reference(xb)
    assert outb.dtype == jnp.bfloat16
    assert jnp.array_equal(outb, refb), "mismatch (bf16 path)"

    print("KERNEL_OK")
</pallas_src>

<mosaic_0001>
module attributes {stable_mosaic.version = 11 : i64} {
  func.func @_shift_kernel_halo(%arg0: i32, %arg1: i32, %arg2: memref<1x4x16x8xf32, #tpu.memory_space<vmem>>, %arg3: memref<1x1x16x8xf32, #tpu.memory_space<vmem>>, %arg4: memref<1x1x16x8xf32, #tpu.memory_space<vmem>>, %arg5: memref<1x4x16x8xf32, #tpu.memory_space<vmem>>) attributes {dimension_semantics = [#tpu.dimension_semantics<parallel>, #tpu.dimension_semantics<parallel>], iteration_bounds = array<i64: 2, 4>, scalar_prefetch = 0 : i64, scratch_operands = 0 : i64, tpu.core_type = #tpu.core_type<tc>, window_params = [{transform_indices = @transform_0, window_bounds = array<i64: 1, 4, 16, 8>}, {transform_indices = @transform_1, window_bounds = array<i64: 1, 1, 16, 8>}, {transform_indices = @transform_2, window_bounds = array<i64: 1, 1, 16, 8>}, {transform_indices = @transform_3, window_bounds = array<i64: 1, 4, 16, 8>}]} {
    %0 = tpu.iota {dimensions = array<i32: 3>} : vector<1x1x1x8xi32>
    %c2_i32 = arith.constant 2 : i32
    %1 = vector.broadcast %c2_i32 : i32 to vector<1x1x1x8xi32>
    %2 = arith.cmpi slt, %0, %1 : vector<1x1x1x8xi32>
    %c4_i32 = arith.constant 4 : i32
    %3 = vector.broadcast %c4_i32 : i32 to vector<1x1x1x8xi32>
    %4 = arith.cmpi slt, %0, %3 : vector<1x1x1x8xi32>
    %c6_i32 = arith.constant 6 : i32
    %5 = vector.broadcast %c6_i32 : i32 to vector<1x1x1x8xi32>
    %6 = arith.cmpi slt, %0, %5 : vector<1x1x1x8xi32>
    %c0 = arith.constant 0 : index
    %c0_0 = arith.constant 0 : index
    %c0_1 = arith.constant 0 : index
    %c0_2 = arith.constant 0 : index
    %7 = vector.load %arg3[%c0, %c0_0, %c0_1, %c0_2] : memref<1x1x16x8xf32, #tpu.memory_space<vmem>>, vector<1x1x16x8xf32>
    %c0_3 = arith.constant 0 : index
    %c1 = arith.constant 1 : index
    %c0_4 = arith.constant 0 : index
    %c0_5 = arith.constant 0 : index
    %8 = vector.load %arg2[%c0_3, %c1, %c0_4, %c0_5] : memref<1x4x16x8xf32, #tpu.memory_space<vmem>>, vector<1x1x16x8xf32>
    %c0_6 = arith.constant 0 : index
    %c0_7 = arith.constant 0 : index
    %c0_8 = arith.constant 0 : index
    %c0_9 = arith.constant 0 : index
    %9 = vector.load %arg2[%c0_6, %c0_7, %c0_8, %c0_9] : memref<1x4x16x8xf32, #tpu.memory_space<vmem>>, vector<1x1x16x8xf32>
    %10 = vector.extract_strided_slice %9 {offsets = [0, 0, 0, 0], sizes = [1, 1, 1, 8], strides = [1, 1, 1, 1]} : vector<1x1x16x8xf32> to vector<1x1x1x8xf32>
    %11 = vector.extract_strided_slice %9 {offsets = [0, 0, 0, 0], sizes = [1, 1, 15, 8], strides = [1, 1, 1, 1]} : vector<1x1x16x8xf32> to vector<1x1x15x8xf32>
    %12 = tpu.concatenate %10, %11 in 2 : vector<1x1x1x8xf32>, vector<1x1x15x8xf32> -> vector<1x1x16x8xf32>
    %13 = vector.extract_strided_slice %9 {offsets = [0, 0, 1, 0], sizes = [1, 1, 15, 8], strides = [1, 1, 1, 1]} : vector<1x1x16x8xf32> to vector<1x1x15x8xf32>
    %14 = vector.extract_strided_slice %9 {offsets = [0, 0, 15, 0], sizes = [1, 1, 1, 8], strides = [1, 1, 1, 1]} : vector<1x1x16x8xf32> to vector<1x1x1x8xf32>
    %15 = tpu.concatenate %13, %14 in 2 : vector<1x1x15x8xf32>, vector<1x1x1x8xf32> -> vector<1x1x16x8xf32>
    %16 = vector.shape_cast %2 : vector<1x1x1x8xi1> to vector<1x1x1x8xi1>
    %17 = vector.broadcast %16 : vector<1x1x1x8xi1> to vector<1x1x16x8xi1>
    %18 = arith.select %17, %12, %15 : vector<1x1x16x8xi1>, vector<1x1x16x8xf32>
    %19 = vector.shape_cast %6 : vector<1x1x1x8xi1> to vector<1x1x1x8xi1>
    %20 = vector.broadcast %19 : vector<1x1x1x8xi1> to vector<1x1x16x8xi1>
    %21 = arith.select %20, %7, %8 : vector<1x1x16x8xi1>, vector<1x1x16x8xf32>
    %22 = vector.shape_cast %4 : vector<1x1x1x8xi1> to vector<1x1x1x8xi1>
    %23 = vector.broadcast %22 : vector<1x1x1x8xi1> to vector<1x1x16x8xi1>
    %24 = arith.select %23, %18, %21 : vector<1x1x16x8xi1>, vector<1x1x16x8xf32>
    %c0_10 = arith.constant 0 : index
    %c0_11 = arith.constant 0 : index
    %c0_12 = arith.constant 0 : index
    %c0_13 = arith.constant 0 : index
    %25 = vector.load %arg5[%c0_10, %c0_11, %c0_12, %c0_13] : memref<1x4x16x8xf32, #tpu.memory_space<vmem>>, vector<1x1x16x8xf32>
    tpu.vector_store %arg5[%c0_10, %c0_11, %c0_12, %c0_13], %24 {strides = array<i32>} : memref<1x4x16x8xf32, #tpu.memory_space<vmem>>, vector<1x1x16x8xf32>,
    %c0_14 = arith.constant 0 : index
    %c1_15 = arith.constant 1 : index
    %c0_16 = arith.constant 0 : index
    %c0_17 = arith.constant 0 : index
    %26 = vector.load %arg2[%c0_14, %c1_15, %c0_16, %c0_17] : memref<1x4x16x8xf32, #tpu.memory_space<vmem>>, vector<1x2x16x8xf32>
    %c0_18 = arith.constant 0 : index
    %c0_19 = arith.constant 0 : index
    %c0_20 = arith.constant 0 : index
    %c0_21 = arith.constant 0 : index
    %27 = vector.load %arg2[%c0_18, %c0_19, %c0_20, %c0_21] : memref<1x4x16x8xf32, #tpu.memory_space<vmem>>, vector<1x2x16x8xf32>
    %c0_22 = arith.constant 0 : index
    %c2 = arith.constant 2 : index
    %c0_23 = arith.constant 0 : index
    %c0_24 = arith.constant 0 : index
    %28 = vector.load %arg2[%c0_22, %c2, %c0_23, %c0_24] : memref<1x4x16x8xf32, #tpu.memory_space<vmem>>, vector<1x2x16x8xf32>
    %29 = vector.extract_strided_slice %26 {offsets = [0, 0, 0, 0], sizes = [1, 2, 1, 8], strides = [1, 1, 1, 1]} : vector<1x2x16x8xf32> to vector<1x2x1x8xf32>
    %30 = vector.extract_strided_slice %26 {offsets = [0, 0, 0, 0], sizes = [1, 2, 15, 8], strides = [1, 1, 1, 1]} : vector<1x2x16x8xf32> to vector<1x2x15x8xf32>
    %31 = tpu.concatenate %29, %30 in 2 : vector<1x2x1x8xf32>, vector<1x2x15x8xf32> -> vector<1x2x16x8xf32>
    %32 = vector.extract_strided_slice %26 {offsets = [0, 0, 1, 0], sizes = [1, 2, 15, 8], strides = [1, 1, 1, 1]} : vector<1x2x16x8xf32> to vector<1x2x15x8xf32>
    %33 = vector.extract_strided_slice %26 {offsets = [0, 0, 15, 0], sizes = [1, 2, 1, 8], strides = [1, 1, 1, 1]} : vector<1x2x16x8xf32> to vector<1x2x1x8xf32>
    %34 = tpu.concatenate %32, %33 in 2 : vector<1x2x15x8xf32>, vector<1x2x1x8xf32> -> vector<1x2x16x8xf32>
    %35 = vector.shape_cast %2 : vector<1x1x1x8xi1> to vector<1x1x1x8xi1>
    %36 = vector.broadcast %35 : vector<1x1x1x8xi1> to vector<1x2x16x8xi1>
    %37 = arith.select %36, %31, %34 : vector<1x2x16x8xi1>, vector<1x2x16x8xf32>
    %38 = vector.shape_cast %6 : vector<1x1x1x8xi1> to vector<1x1x1x8xi1>
    %39 = vector.broadcast %38 : vector<1x1x1x8xi1> to vector<1x2x16x8xi1>
    %40 = arith.select %39, %27, %28 : vector<1x2x16x8xi1>, vector<1x2x16x8xf32>
    %41 = vector.shape_cast %4 : vector<1x1x1x8xi1> to vector<1x1x1x8xi1>
    %42 = vector.broadcast %41 : vector<1x1x1x8xi1> to vector<1x2x16x8xi1>
    %43 = arith.select %42, %37, %40 : vector<1x2x16x8xi1>, vector<1x2x16x8xf32>
    %c0_25 = arith.constant 0 : index
    %c1_26 = arith.constant 1 : index
    %c0_27 = arith.constant 0 : index
    %c0_28 = arith.constant 0 : index
    %44 = vector.load %arg5[%c0_25, %c1_26, %c0_27, %c0_28] : memref<1x4x16x8xf32, #tpu.memory_space<vmem>>, vector<1x2x16x8xf32>
    tpu.vector_store %arg5[%c0_25, %c1_26, %c0_27, %c0_28], %43 {strides = array<i32>} : memref<1x4x16x8xf32, #tpu.memory_space<vmem>>, vector<1x2x16x8xf32>,
    %c0_29 = arith.constant 0 : index
    %c0_30 = arith.constant 0 : index
    %c0_31 = arith.constant 0 : index
    %c0_32 = arith.constant 0 : index
    %45 = vector.load %arg4[%c0_29, %c0_30, %c0_31, %c0_32] : memref<1x1x16x8xf32, #tpu.memory_space<vmem>>, vector<1x1x16x8xf32>
    %c0_33 = arith.constant 0 : index
    %c3 = arith.constant 3 : index
    %c0_34 = arith.constant 0 : index
    %c0_35 = arith.constant 0 : index
    %46 = vector.load %arg2[%c0_33, %c3, %c0_34, %c0_35] : memref<1x4x16x8xf32, #tpu.memory_space<vmem>>, vector<1x1x16x8xf32>
    %c0_36 = arith.constant 0 : index
    %c2_37 = arith.constant 2 : index
    %c0_38 = arith.constant 0 : index
    %c0_39 = arith.constant 0 : index
    %47 = vector.load %arg2[%c0_36, %c2_37, %c0_38, %c0_39] : memref<1x4x16x8xf32, #tpu.memory_space<vmem>>, vector<1x1x16x8xf32>
    %48 = vector.extract_strided_slice %46 {offsets = [0, 0, 0, 0], sizes = [1, 1, 1, 8], strides = [1, 1, 1, 1]} : vector<1x1x16x8xf32> to vector<1x1x1x8xf32>
    %49 = vector.extract_strided_slice %46 {offsets = [0, 0, 0, 0], sizes = [1, 1, 15, 8], strides = [1, 1, 1, 1]} : vector<1x1x16x8xf32> to vector<1x1x15x8xf32>
    %50 = tpu.concatenate %48, %49 in 2 : vector<1x1x1x8xf32>, vector<1x1x15x8xf32> -> vector<1x1x16x8xf32>
    %51 = vector.extract_strided_slice %46 {offsets = [0, 0, 1, 0], sizes = [1, 1, 15, 8], strides = [1, 1, 1, 1]} : vector<1x1x16x8xf32> to vector<1x1x15x8xf32>
    %52 = vector.extract_strided_slice %46 {offsets = [0, 0, 15, 0], sizes = [1, 1, 1, 8], strides = [1, 1, 1, 1]} : vector<1x1x16x8xf32> to vector<1x1x1x8xf32>
    %53 = tpu.concatenate %51, %52 in 2 : vector<1x1x15x8xf32>, vector<1x1x1x8xf32> -> vector<1x1x16x8xf32>
    %54 = vector.shape_cast %2 : vector<1x1x1x8xi1> to vector<1x1x1x8xi1>
    %55 = vector.broadcast %54 : vector<1x1x1x8xi1> to vector<1x1x16x8xi1>
    %56 = arith.select %55, %50, %53 : vector<1x1x16x8xi1>, vector<1x1x16x8xf32>
    %57 = vector.shape_cast %6 : vector<1x1x1x8xi1> to vector<1x1x1x8xi1>
    %58 = vector.broadcast %57 : vector<1x1x1x8xi1> to vector<1x1x16x8xi1>
    %59 = arith.select %58, %47, %45 : vector<1x1x16x8xi1>, vector<1x1x16x8xf32>
    %60 = vector.shape_cast %4 : vector<1x1x1x8xi1> to vector<1x1x1x8xi1>
    %61 = vector.broadcast %60 : vector<1x1x1x8xi1> to vector<1x1x16x8xi1>
    %62 = arith.select %61, %56, %59 : vector<1x1x16x8xi1>, vector<1x1x16x8xf32>
    %c0_40 = arith.constant 0 : index
    %c3_41 = arith.constant 3 : index
    %c0_42 = arith.constant 0 : index
    %c0_43 = arith.constant 0 : index
    %63 = vector.load %arg5[%c0_40, %c3_41, %c0_42, %c0_43] : memref<1x4x16x8xf32, #tpu.memory_space<vmem>>, vector<1x1x16x8xf32>
    tpu.vector_store %arg5[%c0_40, %c3_41, %c0_42, %c0_43], %62 {strides = array<i32>} : memref<1x4x16x8xf32, #tpu.memory_space<vmem>>, vector<1x1x16x8xf32>,
    return
  }
  func.func @transform_0(%arg0: i32, %arg1: i32) -> (i32, i32, i32, i32) {
    %c0_i32 = arith.constant 0 : i32
    %c0_i32_0 = arith.constant 0 : i32
    %c0_i32_1 = arith.constant 0 : i32
    return %arg0, %arg1, %c0_i32, %c0_i32_0 : i32, i32, i32, i32
  }
  func.func @transform_1(%arg0: i32, %arg1: i32) -> (i32, i32, i32, i32) {
    %c4_i32 = arith.constant 4 : i32
    %0 = arith.muli %arg1, %c4_i32 : i32
    %c1_i32 = arith.constant 1 : i32
    %1 = arith.subi %0, %c1_i32 : i32
    %c0_i32 = arith.constant 0 : i32
    %2 = arith.maxsi %1, %c0_i32 : i32
    %c0_i32_0 = arith.constant 0 : i32
    %c0_i32_1 = arith.constant 0 : i32
    %c0_i32_2 = arith.constant 0 : i32
    return %arg0, %2, %c0_i32_0, %c0_i32_1 : i32, i32, i32, i32
  }
  func.func @transform_2(%arg0: i32, %arg1: i32) -> (i32, i32, i32, i32) {
    %c4_i32 = arith.constant 4 : i32
    %0 = arith.muli %arg1, %c4_i32 : i32
    %c4_i32_0 = arith.constant 4 : i32
    %1 = arith.addi %0, %c4_i32_0 : i32
    %c15_i32 = arith.constant 15 : i32
    %2 = arith.minsi %1, %c15_i32 : i32
    %c0_i32 = arith.constant 0 : i32
    %c0_i32_1 = arith.constant 0 : i32
    %c0_i32_2 = arith.constant 0 : i32
    return %arg0, %2, %c0_i32, %c0_i32_1 : i32, i32, i32, i32
  }
  func.func @transform_3(%arg0: i32, %arg1: i32) -> (i32, i32, i32, i32) {
    %c0_i32 = arith.constant 0 : i32
    %c0_i32_0 = arith.constant 0 : i32
    %c0_i32_1 = arith.constant 0 : i32
    return %arg0, %arg1, %c0_i32, %c0_i32_0 : i32, i32, i32, i32
  }
}

</mosaic_0001>

<llo_original>
// kernel: tpu_custom_call.1
$region0: #{tpu_custom_call.1}
  #allocation0 [shape = 'u32[]', space=smem, size = 0x4, offset = 0x4, fixed_abs, tag = 'smem constant byte address 0x4 - core index']
  #allocation1 [shape = 'u32[144,128]{1,0:T(1,128)}', space=vmem, size = 0x12000, scoped, tag = 'internal scratch']
  %s0 = inlined_call_operand.vmem [shape: f32[2,16,16,8], index: 0, kind: input, shape index: {}]
  %s1 = inlined_call_operand.vmem [shape: f32[2,16,16,8], index: 1, kind: input, shape index: {}]
  %s2 = inlined_call_operand.vmem [shape: f32[2,16,16,8], index: 2, kind: input, shape index: {}]
  %s3 = inlined_call_operand.vmem [shape: f32[2,16,16,8], index: 3, kind: output, shape index: {}]
  %s4 = sld [smem:[#allocation0]]
  $region45: #{tpu_custom_call.1} parent=0
    _
  %s6 = ssub.s32 1, %s4
  %s7 = scalar_select 0, %s6, %s4
  loop: start=0, step=1, limit=10
  $region2: #{tpu_custom_call.1} parent=0 // loop_pre_header
    _
  $region3: #{tpu_custom_call.1} parent=0 // loop_header
    %s9 = sphi 0, %s13
    %p10 = scmp.ge.s32.totalorder %s9, 10
    %s16 = sphi 0, %s28
    %s17 = sphi 0, %s24
    %s18 = sphi 0, %s16
    %s19 = sphi 0, %s17
    %s20 = sphi 0, %s18
    %s21 = sphi 0, %s19
    %s33 = sphi 0, %s35
    %s36 = sphi 0, %s33
    %s37 = sphi 0, %s36
    %s53 = sphi 0, %s37
    %s69 = sphi 0, %s71
    %s72 = sphi 0, %s69
    %s73 = sphi 0, %s72
    %s89 = sphi 0, %s73
    %s105 = sphi 0, %s107
    %s108 = sphi 0, %s105
    %s109 = sphi 0, %s108
    %s125 = sphi 0, %s109
    %s133 = sphi 0, %s135
    %s136 = sphi 0, %s133
    %s137 = sphi 0, %s136
    %s153 = sphi 0, %s137
  $region4: #{tpu_custom_call.1} parent=0 // loop_header_branch
    %12 = sbr.rel (%p10) target = $region8
  $region5: #{tpu_custom_call.1} parent=0 // loop_body
    %s14 = ssub.s32 %s9, 1
    %s15 = ssub.s32 %s9, 2
    %s22 = sadd.s32 1, %s17
    %p23 = scmp.ge.s32.totalorder %s22, 4
    %s24 = scalar_select %p23, 0, %s22
    %s25 = sadd.s32 1, %s16
    %s26 = scalar_select %p23, %s25, %s16
    %p27 = scmp.ge.s32.totalorder %s26, 2
    %s28 = scalar_select %p27, 0, %s26
    %s29 = ssub.s32 %s16, %s28
    %s30 = ssub.s32 %s17, %s24
    %s31 = sor.u32 %s29, %s30
    %p32 = scmp.eq.s32.totalorder %s31, 0
    %s34 = sadd.s32 %s33, 1
    %s35 = scalar_select %p32, %s33, %s34
    %p38 = pneg %p32
    %p39 = scmp.eq.s32.totalorder %s9, 7
    %p40 = por %p38, %p39
    %p41 = scmp.ne.s32.totalorder %s33, %s36
    %p42 = scmp.eq.s32.totalorder %s9, 0
    %p43 = por %p41, %p42
    %p44 = scmp.ne.s32.totalorder %s33, %s36
    %p45 = scmp.eq.s32.totalorder %s14, 7
    %p46 = por %p44, %p45
    %p47 = scmp.ne.s32.totalorder %s36, %s37
    %p48 = scmp.eq.s32.totalorder %s14, 0
    %p49 = por %p47, %p48
    %p50 = scmp.ne.s32.totalorder %s36, %s37
    %p51 = scmp.eq.s32.totalorder %s15, 7
    %p52 = por %p50, %p51
    %p54 = scmp.ne.s32.totalorder %s37, %s53
    %p55 = scmp.eq.s32.totalorder %s15, 0
    %p56 = por %p54, %p55
    %s57 = smul.u32 %s17, 4
    %s58 = ssub.s32 %s57, 1
    %p59 = scmp.gt.s32.totalorder %s58, 0
    %s60 = scalar_select %p59, %s58, 0
    %s61 = smul.u32 %s24, 4
    %s62 = ssub.s32 %s61, 1
    %p63 = scmp.gt.s32.totalorder %s62, 0
    %s64 = scalar_select %p63, %s62, 0
    %s65 = ssub.s32 %s16, %s28
    %s66 = ssub.s32 %s60, %s64
    %s67 = sor.u32 %s65, %s66
    %p68 = scmp.eq.s32.totalorder %s67, 0
    %s70 = sadd.s32 %s69, 1
    %s71 = scalar_select %p68, %s69, %s70
    %p74 = pneg %p68
    %p75 = scmp.eq.s32.totalorder %s9, 7
    %p76 = por %p74, %p75
    %p77 = scmp.ne.s32.totalorder %s69, %s72
    %p78 = scmp.eq.s32.totalorder %s9, 0
    %p79 = por %p77, %p78
    %p80 = scmp.ne.s32.totalorder %s69, %s72
    %p81 = scmp.eq.s32.totalorder %s14, 7
    %p82 = por %p80, %p81
    %p83 = scmp.ne.s32.totalorder %s72, %s73
    %p84 = scmp.eq.s32.totalorder %s14, 0
    %p85 = por %p83, %p84
    %p86 = scmp.ne.s32.totalorder %s72, %s73
    %p87 = scmp.eq.s32.totalorder %s15, 7
    %p88 = por %p86, %p87
    %p90 = scmp.ne.s32.totalorder %s73, %s89
    %p91 = scmp.eq.s32.totalorder %s15, 0
    %p92 = por %p90, %p91
    %s93 = smul.u32 %s17, 4
    %s94 = sadd.s32 %s93, 4
    %p95 = scmp.lt.s32.totalorder %s94, 15
    %s96 = scalar_select %p95, %s94, 15
    %s97 = smul.u32 %s24, 4
    %s98 = sadd.s32 %s97, 4
    %p99 = scmp.lt.s32.totalorder %s98, 15
    %s100 = scalar_select %p99, %s98, 15
    %s101 = ssub.s32 %s16, %s28
    %s102 = ssub.s32 %s96, %s100
    %s103 = sor.u32 %s101, %s102
    %p104 = scmp.eq.s32.totalorder %s103, 0
    %s106 = sadd.s32 %s105, 1
    %s107 = scalar_select %p104, %s105, %s106
    %p110 = pneg %p104
    %p111 = scmp.eq.s32.totalorder %s9, 7
    %p112 = por %p110, %p111
    %p113 = scmp.ne.s32.totalorder %s105, %s108
    %p114 = scmp.eq.s32.totalorder %s9, 0
    %p115 = por %p113, %p114
    %p116 = scmp.ne.s32.totalorder %s105, %s108
    %p117 = scmp.eq.s32.totalorder %s14, 7
    %p118 = por %p116, %p117
    %p119 = scmp.ne.s32.totalorder %s108, %s109
    %p120 = scmp.eq.s32.totalorder %s14, 0
    %p121 = por %p119, %p120
    %p122 = scmp.ne.s32.totalorder %s108, %s109
    %p123 = scmp.eq.s32.totalorder %s15, 7
    %p124 = por %p122, %p123
    %p126 = scmp.ne.s32.totalorder %s109, %s125
    %p127 = scmp.eq.s32.totalorder %s15, 0
    %p128 = por %p126, %p127
    %s129 = ssub.s32 %s16, %s28
    %s130 = ssub.s32 %s17, %s24
    %s131 = sor.u32 %s129, %s130
    %p132 = scmp.eq.s32.totalorder %s131, 0
    %s134 = sadd.s32 %s133, 1
    %s135 = scalar_select %p132, %s133, %s134
    %p138 = pneg %p132
    %p139 = scmp.eq.s32.totalorder %s9, 7
    %p140 = por %p138, %p139
    %p141 = scmp.ne.s32.totalorder %s133, %s136
    %p142 = scmp.eq.s32.totalorder %s9, 0
    %p143 = por %p141, %p142
    %p144 = scmp.ne.s32.totalorder %s133, %s136
    %p145 = scmp.eq.s32.totalorder %s14, 7
    %p146 = por %p144, %p145
    %p147 = scmp.ne.s32.totalorder %s136, %s137
    %p148 = scmp.eq.s32.totalorder %s14, 0
    %p149 = por %p147, %p148
    %p150 = scmp.ne.s32.totalorder %s136, %s137
    %p151 = scmp.eq.s32.totalorder %s15, 7
    %p152 = por %p150, %p151
    %p154 = scmp.ne.s32.totalorder %s137, %s153
    %p155 = scmp.eq.s32.totalorder %s15, 0
    %p156 = por %p154, %p155
    %p157 = scmp.le.s32.totalorder 1, %s9
    %p158 = scmp.lt.s32.totalorder %s9, 9
    %p159 = pnand %p157, %p158
    %p160 = pneg %p159
    // Predicated region
    $region9: #{tpu_custom_call.1} parent=5 // pred_check
      _
    $region10: #{tpu_custom_call.1} parent=5 // pred_check_branch
      %162 = sbr.rel (%p159) target = $region12
    $region11: #{tpu_custom_call.1} parent=5 // pred_region
      %s163 = ssub.s32 %s9, 1
    $region12: #{tpu_custom_call.1} parent=5 // pred_fallthru
      _
    %p164 = scmp.lt.s32.totalorder %s9, 8
    // Predicated region
    $region13: #{tpu_custom_call.1} parent=5 // pred_check
      %p165 = pneg %p164
    $region14: #{tpu_custom_call.1} parent=5 // pred_check_branch
      %167 = sbr.rel (%p165) target = $region16
    $region15: #{tpu_custom_call.1} parent=5 // pred_region
      // Predicated region
      $region17: #{tpu_custom_call.1} parent=15 // pred_check
        %p168 = pneg %p43
      $region18: #{tpu_custom_call.1} parent=15 // pred_check_branch
        %170 = sbr.rel (%p168) target = $region20
      $region19: #{tpu_custom_call.1} parent=15 // pred_region
        %s171 = smul.u32 4, %s17
        %p172 = scmp.lt.s32.totalorder %s16, 1
        %s173 = scalar_select %p172, %s16, 1
        %p174 = scmp.lt.s32.totalorder %s171, 15
        %s175 = scalar_select %p174, %s171, 15
        %s176 = smul.addr %s175, 2
        %s177 = smul.addr %s173, 32
        %s178 = sadd.s32 %s176, %s177
        %s179 = smul.addr %s178, 8
        %s180 = scalar_lea.vmem %s0, %s179
        %s181 = smul.u32 4, %s17
      $region20: #{tpu_custom_call.1} parent=15 // pred_fallthru
        _
      // Predicated region
      $region21: #{tpu_custom_call.1} parent=15 // pred_check
        %p182 = pneg %p79
      $region22: #{tpu_custom_call.1} parent=15 // pred_check_branch
        %184 = sbr.rel (%p182) target = $region24
      $region23: #{tpu_custom_call.1} parent=15 // pred_region
        %s185 = smul.u32 %s17, 4
        %s186 = ssub.s32 %s185, 1
        %p187 = scmp.gt.s32.totalorder %s186, 0
        %s188 = scalar_select %p187, %s186, 0
        %p189 = scmp.lt.s32.totalorder %s16, 1
        %s190 = scalar_select %p189, %s16, 1
        %p191 = scmp.lt.s32.totalorder %s188, 15
        %s192 = scalar_select %p191, %s188, 15
        %s193 = smul.addr %s192, 2
        %s194 = smul.addr %s190, 32
        %s195 = sadd.s32 %s193, %s194
        %s196 = smul.addr %s195, 8
        %s197 = scalar_lea.vmem %s1, %s196
        %s198 = smul.u32 %s17, 4
        %s199 = ssub.s32 %s198, 1
        %p200 = scmp.gt.s32.totalorder %s199, 0
        %s201 = scalar_select %p200, %s199, 0
      $region24: #{tpu_custom_call.1} parent=15 // pred_fallthru
        _
      // Predicated region
      $region25: #{tpu_custom_call.1} parent=15 // pred_check
        %p202 = pneg %p115
      $region26: #{tpu_custom_call.1} parent=15 // pred_check_branch
        %204 = sbr.rel (%p202) target = $region28
      $region27: #{tpu_custom_call.1} parent=15 // pred_region
        %s205 = smul.u32 %s17, 4
        %s206 = sadd.s32 %s205, 4
        %p207 = scmp.lt.s32.totalorder %s206, 15
        %s208 = scalar_select %p207, %s206, 15
        %p209 = scmp.lt.s32.totalorder %s16, 1
        %s210 = scalar_select %p209, %s16, 1
        %p211 = scmp.lt.s32.totalorder %s208, 15
        %s212 = scalar_select %p211, %s208, 15
        %s213 = smul.addr %s212, 2
        %s214 = smul.addr %s210, 32
        %s215 = sadd.s32 %s213, %s214
        %s216 = smul.addr %s215, 8
        %s217 = scalar_lea.vmem %s2, %s216
        %s218 = smul.u32 %s17, 4
        %s219 = sadd.s32 %s218, 4
        %p220 = scmp.lt.s32.totalorder %s219, 15
        %s221 = scalar_select %p220, %s219, 15
      $region28: #{tpu_custom_call.1} parent=15 // pred_fallthru
        _
    $region16: #{tpu_custom_call.1} parent=5 // pred_fallthru
      _
    %p222 = scmp.le.s32.totalorder 1, %s9
    %p223 = scmp.lt.s32.totalorder %s9, 9
    %p224 = pnand %p222, %p223
    %p225 = pneg %p224
    // Predicated region
    $region29: #{tpu_custom_call.1} parent=5 // pred_check
      _
    $region30: #{tpu_custom_call.1} parent=5 // pred_check_branch
      %227 = sbr.rel (%p224) target = $region32
    $region31: #{tpu_custom_call.1} parent=5 // pred_region
      %s228 = ssub.s32 %s9, 1
      %s229 = smul.u32 4, %s19
      %p230 = scmp.lt.s32.totalorder %s18, 1
      %s231 = scalar_select %p230, %s18, 1
      %p232 = scmp.lt.s32.totalorder %s229, 15
      %s233 = scalar_select %p232, %s229, 15
      %s234 = smul.addr %s233, 2
      %s235 = smul.addr %s231, 32
      %s236 = sadd.s32 %s234, %s235
      %s237 = smul.addr %s236, 8
      %s238 = scalar_lea.vmem %s0, %s237
      %p239 = pneg %p49
      %p240 = pneg %p46
      %s241 = smul.u32 %s19, 4
      %s242 = ssub.s32 %s241, 1
      %p243 = scmp.gt.s32.totalorder %s242, 0
      %s244 = scalar_select %p243, %s242, 0
      %p245 = scmp.lt.s32.totalorder %s18, 1
      %s246 = scalar_select %p245, %s18, 1
      %p247 = scmp.lt.s32.totalorder %s244, 15
      %s248 = scalar_select %p247, %s244, 15
      %s249 = smul.addr %s248, 2
      %s250 = smul.addr %s246, 32
      %s251 = sadd.s32 %s249, %s250
      %s252 = smul.addr %s251, 8
      %s253 = scalar_lea.vmem %s1, %s252
      %p254 = pneg %p85
      %p255 = pneg %p82
      %s256 = smul.u32 %s19, 4
      %s257 = sadd.s32 %s256, 4
      %p258 = scmp.lt.s32.totalorder %s257, 15
      %s259 = scalar_select %p258, %s257, 15
      %p260 = scmp.lt.s32.totalorder %s18, 1
      %s261 = scalar_select %p260, %s18, 1
      %p262 = scmp.lt.s32.totalorder %s259, 15
      %s263 = scalar_select %p262, %s259, 15
      %s264 = smul.addr %s263, 2
      %s265 = smul.addr %s261, 32
      %s266 = sadd.s32 %s264, %s265
      %s267 = smul.addr %s266, 8
      %s268 = scalar_lea.vmem %s2, %s267
      %p269 = pneg %p121
      %p270 = pneg %p118
      %p271 = pneg %p149
      %p272 = pneg %p146
      %s273 = smul.u32 4, %s19
      %p274 = scmp.lt.s32.totalorder %s18, 1
      %s275 = scalar_select %p274, %s18, 1
      %p276 = scmp.lt.s32.totalorder %s273, 15
      %s277 = scalar_select %p276, %s273, 15
      %s278 = smul.addr %s277, 2
      %s279 = smul.addr %s275, 32
      %s280 = sadd.s32 %s278, %s279
      %s281 = smul.addr %s280, 8
      %s282 = scalar_lea.vmem %s3, %s281
      %s283 = smul.u32 4, %s19
      %p284 = scmp.lt.s32.totalorder %s18, 1
      %s285 = scalar_select %p284, %s18, 1
      %p286 = scmp.lt.s32.totalorder %s283, 15
      %s287 = scalar_select %p286, %s283, 15
      %s288 = smul.addr %s287, 2
      %s289 = smul.addr %s285, 32
      %s290 = sadd.s32 %s288, %s289
      %s291 = smul.addr %s290, 8
      %s292 = scalar_lea.vmem %s0, %s291
      %s293 = smul.u32 4, %s19
      %s294 = smul.u32 %s19, 4
      %s295 = ssub.s32 %s294, 1
      %p296 = scmp.gt.s32.totalorder %s295, 0
      %s297 = scalar_select %p296, %s295, 0
      %p298 = scmp.lt.s32.totalorder %s18, 1
      %s299 = scalar_select %p298, %s18, 1
      %p300 = scmp.lt.s32.totalorder %s297, 15
      %s301 = scalar_select %p300, %s297, 15
      %s302 = smul.addr %s301, 2
      %s303 = smul.addr %s299, 32
      %s304 = sadd.s32 %s302, %s303
      %s305 = smul.addr %s304, 8
      %s306 = scalar_lea.vmem %s1, %s305
      %s307 = smul.u32 %s19, 4
      %s308 = ssub.s32 %s307, 1
      %p309 = scmp.gt.s32.totalorder %s308, 0
      %s310 = scalar_select %p309, %s308, 0
      %s311 = smul.u32 %s19, 4
      %s312 = sadd.s32 %s311, 4
      %p313 = scmp.lt.s32.totalorder %s312, 15
      %s314 = scalar_select %p313, %s312, 15
      %p315 = scmp.lt.s32.totalorder %s18, 1
      %s316 = scalar_select %p315, %s18, 1
      %p317 = scmp.lt.s32.totalorder %s314, 15
      %s318 = scalar_select %p317, %s314, 15
      %s319 = smul.addr %s318, 2
      %s320 = smul.addr %s316, 32
      %s321 = sadd.s32 %s319, %s320
      %s322 = smul.addr %s321, 8
      %s323 = scalar_lea.vmem %s2, %s322
      %s324 = smul.u32 %s19, 4
      %s325 = sadd.s32 %s324, 4
      %p326 = scmp.lt.s32.totalorder %s325, 15
      %s327 = scalar_select %p326, %s325, 15
      %s328 = smul.u32 4, %s19
      %p329 = scmp.lt.s32.totalorder %s18, 1
      %s330 = scalar_select %p329, %s18, 1
      %p331 = scmp.lt.s32.totalorder %s328, 15
      %s332 = scalar_select %p331, %s328, 15
      %s333 = smul.addr %s332, 2
      %s334 = smul.addr %s330, 32
      %s335 = sadd.s32 %s333, %s334
      %s336 = smul.addr %s335, 8
      %s337 = scalar_lea.vmem %s3, %s336
      %s338 = smul.u32 4, %s19
      %v339 = vlaneseq
      %v340 = vand.u32 %v339, 127
      %vm341 = vcmp.lt.s32.totalorder %v340, 2
      %vm342 = vcmp.lt.s32.totalorder %v340, 4
      %vm343 = vcmp.lt.s32.totalorder %v340, 6
      %v344 = vld [vmem:[%s306] sm:$0xff]
      %v345 = vld [vmem:[%s306 + $0x8] sm:$0xff]
      %s346 = scalar_lea.vmem %s292, 16
      %v347 = vld [vmem:[%s346] sm:$0xff]
      %v348 = vld [vmem:[%s346 + $0x8] sm:$0xff]
      %v349 = vld [vmem:[%s292] sm:$0xff]
      %v350 = vld [vmem:[%s292 + $0x8] sm:$0xff]
      %vm353 = vcmask 1040384
      %v354 = vrot.slane %v349, 7
      %v355 = vrot.slane %v350, 7
      %v356 = vsel %vm353, %v354, %v355
      %v359 = vsel %vm353, %v349, %v354
      %vm360 = vcmask 1046528
      %v361 = vrot.slane %v349, 1
      %v362 = vrot.slane %v350, 1
      %v363 = vsel %vm360, %v361, %v362
      %v366 = vsel %vm360, %v362, %v350
      %v367 = vsel %vm341, 1, 0
      %vm368 = vcmp.eq.s32.totalorder %v367, 1
      %v369 = vsel %vm368, %v359, %v363
      %v370 = vsel %vm368, %v356, %v366
      %v371 = vsel %vm343, 1, 0
      %vm372 = vcmp.eq.s32.totalorder %v371, 1
      %v373 = vsel %vm372, %v344, %v347
      %v374 = vsel %vm372, %v345, %v348
      %v375 = vsel %vm342, 1, 0
      %vm376 = vcmp.eq.s32.totalorder %v375, 1
      %v377 = vsel %vm376, %v369, %v373
      %v378 = vsel %vm376, %v370, %v374
      %vm379 = vcmask 64512
      %380 = vst.msk [vmem:[%s337] sm:$0xff] %vm379, %v377
      %381 = vst.msk [vmem:[%s337 + $0x8] sm:$0xff] %vm379, %v378
      %v382 = vld [vmem:[%s346] sm:$0xff]
      %v383 = vld [vmem:[%s346 + $0x8] sm:$0xff]
      %v384 = vld [vmem:[%s346 + $0x10] sm:$0xff]
      %v385 = vld [vmem:[%s346 + $0x18] sm:$0xff]
      %v386 = vld [vmem:[%s292] sm:$0xff]
      %v387 = vld [vmem:[%s292 + $0x8] sm:$0xff]
      %v388 = vld [vmem:[%s292 + $0x10] sm:$0xff]
      %v389 = vld [vmem:[%s292 + $0x18] sm:$0xff]
      %s390 = scalar_lea.vmem %s292, 32
      %v391 = vld [vmem:[%s390] sm:$0xff]
      %v392 = vld [vmem:[%s390 + $0x8] sm:$0xff]
      %v393 = vld [vmem:[%s390 + $0x10] sm:$0xff]
      %v394 = vld [vmem:[%s390 + $0x18] sm:$0xff]
      %v399 = vrot.slane %v382, 7
      %v400 = vrot.slane %v383, 7
      %v401 = vsel %vm353, %v399, %v400
      %v402 = vrot.slane %v384, 7
      %v403 = vrot.slane %v385, 7
      %v404 = vsel %vm353, %v402, %v403
      %v409 = vsel %vm353, %v382, %v399
      %v410 = vsel %vm353, %v384, %v402
      %v411 = vrot.slane %v382, 1
      %v412 = vrot.slane %v383, 1
      %v413 = vsel %vm360, %v411, %v412
      %v414 = vrot.slane %v384, 1
      %v415 = vrot.slane %v385, 1
      %v416 = vsel %vm360, %v414, %v415
      %v421 = vsel %vm360, %v412, %v383
      %v422 = vsel %vm360, %v415, %v385
      %v423 = vsel %vm368, %v409, %v413
      %v424 = vsel %vm368, %v401, %v421
      %v425 = vsel %vm368, %v410, %v416
      %v426 = vsel %vm368, %v404, %v422
      %v427 = vsel %vm372, %v386, %v391
      %v428 = vsel %vm372, %v387, %v392
      %v429 = vsel %vm372, %v388, %v393
      %v430 = vsel %vm372, %v389, %v394
      %v431 = vsel %vm376, %v423, %v427
      %v432 = vsel %vm376, %v424, %v428
      %v433 = vsel %vm376, %v425, %v429
      %v434 = vsel %vm376, %v426, %v430
      %s435 = scalar_lea.vmem %s337, 16
      %436 = vst.msk [vmem:[%s435] sm:$0xff] %vm379, %v431
      %437 = vst.msk [vmem:[%s435 + $0x8] sm:$0xff] %vm379, %v432
      %438 = vst.msk [vmem:[%s435 + $0x10] sm:$0xff] %vm379, %v433
      %439 = vst.msk [vmem:[%s435 + $0x18] sm:$0xff] %vm379, %v434
      %v440 = vld [vmem:[%s323] sm:$0xff]
      %v441 = vld [vmem:[%s323 + $0x8] sm:$0xff]
      %s442 = scalar_lea.vmem %s292, 48
      %v443 = vld [vmem:[%s442] sm:$0xff]
      %v444 = vld [vmem:[%s442 + $0x8] sm:$0xff]
      %v445 = vld [vmem:[%s390] sm:$0xff]
      %v446 = vld [vmem:[%s390 + $0x8] sm:$0xff]
      %v449 = vrot.slane %v443, 7
      %v450 = vrot.slane %v444, 7
      %v451 = vsel %vm353, %v449, %v450
      %v454 = vsel %vm353, %v443, %v449
      %v455 = vrot.slane %v443, 1
      %v456 = vrot.slane %v444, 1
      %v457 = vsel %vm360, %v455, %v456
      %v460 = vsel %vm360, %v456, %v444
      %v461 = vsel %vm368, %v454, %v457
      %v462 = vsel %vm368, %v451, %v460
      %v463 = vsel %vm372, %v445, %v440
      %v464 = vsel %vm372, %v446, %v441
      %v465 = vsel %vm376, %v461, %v463
      %v466 = vsel %vm376, %v462, %v464
      %s467 = scalar_lea.vmem %s337, 48
      %468 = vst.msk [vmem:[%s467] sm:$0xff] %vm379, %v465
      %469 = vst.msk [vmem:[%s467 + $0x8] sm:$0xff] %vm379, %v466
      %s470 = smul.u32 4, %s19
      %p471 = scmp.lt.s32.totalorder %s18, 1
      %s472 = scalar_select %p471, %s18, 1
      %p473 = scmp.lt.s32.totalorder %s470, 15
      %s474 = scalar_select %p473, %s470, 15
      %s475 = smul.addr %s474, 2
      %s476 = smul.addr %s472, 32
      %s477 = sadd.s32 %s475, %s476
      %s478 = smul.addr %s477, 8
      %s479 = scalar_lea.vmem %s3, %s478
      // Predicated region
      $region33: #{tpu_custom_call.1} parent=31 // pred_check
        %p480 = pneg %p146
      $region34: #{tpu_custom_call.1} parent=31 // pred_check_branch
        %482 = sbr.rel (%p480) target = $region36
      $region35: #{tpu_custom_call.1} parent=31 // pred_region
        %s483 = smul.u32 4, %s19
      $region36: #{tpu_custom_call.1} parent=31 // pred_fallthru
        _
    $region32: #{tpu_custom_call.1} parent=5 // pred_fallthru
      _
    %p484 = scmp.le.s32.totalorder 2, %s9
    // Predicated region
    $region37: #{tpu_custom_call.1} parent=5 // pred_check
      %p485 = pneg %p484
    $region38: #{tpu_custom_call.1} parent=5 // pred_check_branch
      %487 = sbr.rel (%p485) target = $region40
    $region39: #{tpu_custom_call.1} parent=5 // pred_region
      %s488 = ssub.s32 %s9, 2
      // Predicated region
      $region41: #{tpu_custom_call.1} parent=39 // pred_check
        %p489 = pneg %p152
      $region42: #{tpu_custom_call.1} parent=39 // pred_check_branch
        %491 = sbr.rel (%p489) target = $region44
      $region43: #{tpu_custom_call.1} parent=39 // pred_region
        %s492 = smul.u32 4, %s21
        %p493 = scmp.lt.s32.totalorder %s20, 1
        %s494 = scalar_select %p493, %s20, 1
        %p495 = scmp.lt.s32.totalorder %s492, 15
        %s496 = scalar_select %p495, %s492, 15
        %s497 = smul.addr %s496, 2
        %s498 = smul.addr %s494, 32
        %s499 = sadd.s32 %s497, %s498
        %s500 = smul.addr %s499, 8
        %s501 = scalar_lea.vmem %s3, %s500
      $region44: #{tpu_custom_call.1} parent=39 // pred_fallthru
        _
    $region40: #{tpu_custom_call.1} parent=5 // pred_fallthru
      _
  $region6: #{tpu_custom_call.1} parent=0 // loop_footer
    %s13 = sadd.s32 1, %s9
  $region7: #{tpu_custom_call.1} parent=0 // loop_footer_branch
    %8 = sbr.rel target = $region3
  $region8: #{tpu_custom_call.1} parent=0 // loop_exit
    _

</llo_original>
